<compile_context>
chip_gen: v7x
topology: tpu7x:2x2x1
jax: 0.10.0
libtpu: 0.0.40
codegen_flags: <defaults>
</compile_context>

<pallas_src>
import jax
import jax.numpy as jnp
from jax import lax
from jax.experimental import pallas as pl
from jax.experimental.pallas import tpu as pltpu


def _fused_conv_kernel(w_ref, b_ref, r1_ref, xp_ref, o_ref):
    """Fused conv1(-1)+conv2+relu for one sample.

    w_ref : (C2, C)  SMEM  -- W_eff = W2 @ W1
    b_ref : (C2,)    SMEM  -- b_eff = W2 @ (b1 - 1) + b2
    r1_ref: (C2,)    SMEM  -- relu(b2), value of the outermost 1-px ring
    xp_ref: (1, C, Hp, Wp) VMEM -- input zero-padded by 3 on each spatial side
    o_ref : (1, C2, Hp, Wp) VMEM -- final output (NCHW), Hp=H+6, Wp=W+6
    """
    c_in = xp_ref.shape[1]
    c_out = o_ref.shape[1]
    hp, wp = o_ref.shape[2], o_ref.shape[3]

    # Mask for the outermost 1-pixel ring (conv2's own zero padding region).
    rows = lax.broadcasted_iota(jnp.int32, (hp, wp), 0)
    cols = lax.broadcasted_iota(jnp.int32, (hp, wp), 1)
    outer = (rows == 0) | (rows == hp - 1) | (cols == 0) | (cols == wp - 1)

    # Load the (few) input channel planes once.
    xs = [xp_ref[0, k, :, :] for k in range(c_in)]

    # Unrolled VPU FMAs: o[c] = relu(sum_k W_eff[c,k] * x[k] + b_eff[c]),
    # with the outer ring replaced by the constant relu(b2).
    for c in range(c_out):
        acc = xs[0] * w_ref[c, 0] + b_ref[c]
        for k in range(1, c_in):
            acc = acc + xs[k] * w_ref[c, k]
        acc = jnp.maximum(acc, 0.0)
        o_ref[0, c, :, :] = jnp.where(outer, r1_ref[c], acc)


def model_forward(x, w1, b1, w2, b2):
    """x: (N, 3, H, W) f32 -> (N, 2, H+6, W+6) f32 (same as the torch module)."""
    x = x.astype(jnp.float32)
    n, c_in, h, w = x.shape
    c_out = w2.shape[0]
    hp, wp = h + 6, w + 6

    # Effective fused 1x1 conv (interior + zero-padded region).
    w_eff = (w2 @ w1).astype(jnp.float32)                 # (2, 3)
    b_eff = (w2 @ (b1 - 1.0) + b2).astype(jnp.float32)    # (2,)
    ring1 = jnp.maximum(b2, 0.0).astype(jnp.float32)      # (2,) outer 1-px ring

    # Zero-pad input by 3 (= conv1 pad 2 + conv2 pad 1) so the kernel can
    # evaluate the fused formula at every final output position.
    xp = jnp.pad(x, ((0, 0), (0, 0), (3, 3), (3, 3)))

    return pl.pallas_call(
        _fused_conv_kernel,
        out_shape=jax.ShapeDtypeStruct((n, c_out, hp, wp), jnp.float32),
        grid=(n,),
        in_specs=[
            pl.BlockSpec(memory_space=pltpu.MemorySpace.SMEM),   # w_eff
            pl.BlockSpec(memory_space=pltpu.MemorySpace.SMEM),   # b_eff
            pl.BlockSpec(memory_space=pltpu.MemorySpace.SMEM),   # ring1
            pl.BlockSpec((1, c_in, hp, wp), lambda i: (i, 0, 0, 0)),
        ],
        out_specs=pl.BlockSpec((1, c_out, hp, wp), lambda i: (i, 0, 0, 0)),
        compiler_params=pltpu.CompilerParams(
            dimension_semantics=("parallel",)),
    )(w_eff, b_eff, ring1, xp)


def _reference(x, w1, b1, w2, b2):
    """Pure-JAX reference using lax.conv (NCHW, OIHW)."""
    w1_4d = w1[:, :, None, None]
    w2_4d = w2[:, :, None, None]
    v1 = lax.conv_general_dilated(
        x, w1_4d, window_strides=(1, 1), padding=((2, 2), (2, 2)),
        dimension_numbers=("NCHW", "OIHW", "NCHW"),
    ) + b1[None, :, None, None]
    v1 = v1 - 1.0
    v2 = lax.conv_general_dilated(
        v1, w2_4d, window_strides=(1, 1), padding=((1, 1), (1, 1)),
        dimension_numbers=("NCHW", "OIHW", "NCHW"),
    ) + b2[None, :, None, None]
    return jnp.maximum(v2, 0.0)


if __name__ == "__main__":
    key = jax.random.PRNGKey(0)
    k_x, k_w1, k_b1, k_w2, k_b2 = jax.random.split(key, 5)

    # Small shapes consistent with the module (in_channels fixed at 3).
    N, C, H, W = 2, 3, 16, 16
    x = jax.random.normal(k_x, (N, C, H, W), dtype=jnp.float32)

    # Deterministic parameters for Conv2d(3,4,1) and Conv2d(4,2,1).
    w1 = jax.random.normal(k_w1, (4, 3), dtype=jnp.float32) * 0.1
    b1 = jax.random.normal(k_b1, (4,), dtype=jnp.float32) * 0.1
    w2 = jax.random.normal(k_w2, (2, 4), dtype=jnp.float32) * 0.1
    b2 = jax.random.normal(k_b2, (2,), dtype=jnp.float32) * 0.1

    out = jax.block_until_ready(model_forward(x, w1, b1, w2, b2))
    ref = jax.block_until_ready(_reference(x, w1, b1, w2, b2))

    assert out.shape == (N, 2, H + 6, W + 6), out.shape
    assert jnp.allclose(out, ref, atol=1e-5, rtol=1e-5), float(
        jnp.max(jnp.abs(out - ref))
    )
    print("KERNEL_OK")
</pallas_src>

<mosaic_0001>
module attributes {stable_mosaic.version = 11 : i64} {
  func.func @_fused_conv_kernel(%arg0: i32, %arg1: memref<2x3xf32, #tpu.memory_space<smem>>, %arg2: memref<2xf32, #tpu.memory_space<smem>>, %arg3: memref<2xf32, #tpu.memory_space<smem>>, %arg4: memref<1x3x22x22xf32, #tpu.memory_space<vmem>>, %arg5: memref<1x2x22x22xf32, #tpu.memory_space<vmem>>) attributes {dimension_semantics = [#tpu.dimension_semantics<parallel>], iteration_bounds = array<i64: 2>, scalar_prefetch = 0 : i64, scratch_operands = 0 : i64, tpu.core_type = #tpu.core_type<tc>, window_params = [{transform_indices = @transform_0, window_bounds = array<i64: 2, 3>}, {transform_indices = @transform_1, window_bounds = array<i64: 2>}, {transform_indices = @transform_2, window_bounds = array<i64: 2>}, {transform_indices = @transform_3, window_bounds = array<i64: 1, 3, 22, 22>}, {transform_indices = @transform_4, window_bounds = array<i64: 1, 2, 22, 22>}]} {
    %0 = tpu.iota {dimensions = array<i32: 0>} : vector<22x22xi32>
    %1 = tpu.iota {dimensions = array<i32: 1>} : vector<22x22xi32>
    %c0_i32 = arith.constant 0 : i32
    %2 = vector.broadcast %c0_i32 : i32 to vector<22x22xi32>
    %3 = arith.cmpi eq, %0, %2 : vector<22x22xi32>
    %c21_i32 = arith.constant 21 : i32
    %4 = vector.broadcast %c21_i32 : i32 to vector<22x22xi32>
    %5 = arith.cmpi eq, %0, %4 : vector<22x22xi32>
    %6 = arith.ori %3, %5 : vector<22x22xi1>
    %c0_i32_0 = arith.constant 0 : i32
    %7 = vector.broadcast %c0_i32_0 : i32 to vector<22x22xi32>
    %8 = arith.cmpi eq, %1, %7 : vector<22x22xi32>
    %9 = arith.ori %6, %8 : vector<22x22xi1>
    %c21_i32_1 = arith.constant 21 : i32
    %10 = vector.broadcast %c21_i32_1 : i32 to vector<22x22xi32>
    %11 = arith.cmpi eq, %1, %10 : vector<22x22xi32>
    %12 = arith.ori %9, %11 : vector<22x22xi1>
    %c0 = arith.constant 0 : index
    %c0_2 = arith.constant 0 : index
    %c0_3 = arith.constant 0 : index
    %c0_4 = arith.constant 0 : index
    %13 = vector.load %arg4[%c0, %c0_2, %c0_3, %c0_4] : memref<1x3x22x22xf32, #tpu.memory_space<vmem>>, vector<1x1x22x22xf32>
    %14 = vector.shape_cast %13 : vector<1x1x22x22xf32> to vector<22x22xf32>
    %c0_5 = arith.constant 0 : index
    %c1 = arith.constant 1 : index
    %c0_6 = arith.constant 0 : index
    %c0_7 = arith.constant 0 : index
    %15 = vector.load %arg4[%c0_5, %c1, %c0_6, %c0_7] : memref<1x3x22x22xf32, #tpu.memory_space<vmem>>, vector<1x1x22x22xf32>
    %16 = vector.shape_cast %15 : vector<1x1x22x22xf32> to vector<22x22xf32>
    %c0_8 = arith.constant 0 : index
    %c2 = arith.constant 2 : index
    %c0_9 = arith.constant 0 : index
    %c0_10 = arith.constant 0 : index
    %17 = vector.load %arg4[%c0_8, %c2, %c0_9, %c0_10] : memref<1x3x22x22xf32, #tpu.memory_space<vmem>>, vector<1x1x22x22xf32>
    %18 = vector.shape_cast %17 : vector<1x1x22x22xf32> to vector<22x22xf32>
    %c0_11 = arith.constant 0 : index
    %c0_12 = arith.constant 0 : index
    %19 = memref.load %arg1[%c0_11, %c0_12] : memref<2x3xf32, #tpu.memory_space<smem>>
    %20 = vector.broadcast %19 : f32 to vector<22x22xf32>
    %21 = arith.mulf %14, %20 : vector<22x22xf32>
    %c0_13 = arith.constant 0 : index
    %22 = memref.load %arg2[%c0_13] : memref<2xf32, #tpu.memory_space<smem>>
    %23 = vector.broadcast %22 : f32 to vector<22x22xf32>
    %24 = arith.addf %21, %23 : vector<22x22xf32>
    %c0_14 = arith.constant 0 : index
    %c1_15 = arith.constant 1 : index
    %25 = memref.load %arg1[%c0_14, %c1_15] : memref<2x3xf32, #tpu.memory_space<smem>>
    %26 = vector.broadcast %25 : f32 to vector<22x22xf32>
    %27 = arith.mulf %16, %26 : vector<22x22xf32>
    %28 = arith.addf %24, %27 : vector<22x22xf32>
    %c0_16 = arith.constant 0 : index
    %c2_17 = arith.constant 2 : index
    %29 = memref.load %arg1[%c0_16, %c2_17] : memref<2x3xf32, #tpu.memory_space<smem>>
    %30 = vector.broadcast %29 : f32 to vector<22x22xf32>
    %31 = arith.mulf %18, %30 : vector<22x22xf32>
    %32 = arith.addf %28, %31 : vector<22x22xf32>
    %cst = arith.constant 0.000000e+00 : f32
    %33 = vector.broadcast %cst : f32 to vector<22x22xf32>
    %34 = arith.maximumf %32, %33 : vector<22x22xf32>
    %c0_18 = arith.constant 0 : index
    %35 = memref.load %arg3[%c0_18] : memref<2xf32, #tpu.memory_space<smem>>
    %36 = vector.broadcast %35 : f32 to vector<22x22xf32>
    %37 = arith.select %12, %36, %34 : vector<22x22xi1>, vector<22x22xf32>
    %c0_19 = arith.constant 0 : index
    %c0_20 = arith.constant 0 : index
    %c0_21 = arith.constant 0 : index
    %c0_22 = arith.constant 0 : index
    %38 = vector.load %arg5[%c0_19, %c0_20, %c0_21, %c0_22] : memref<1x2x22x22xf32, #tpu.memory_space<vmem>>, vector<1x1x22x22xf32>
    %39 = vector.shape_cast %38 : vector<1x1x22x22xf32> to vector<22x22xf32>
    %40 = vector.shape_cast %37 : vector<22x22xf32> to vector<1x1x22x22xf32>
    tpu.vector_store %arg5[%c0_19, %c0_20, %c0_21, %c0_22], %40 {strides = array<i32>} : memref<1x2x22x22xf32, #tpu.memory_space<vmem>>, vector<1x1x22x22xf32>,
    %c1_23 = arith.constant 1 : index
    %c0_24 = arith.constant 0 : index
    %41 = memref.load %arg1[%c1_23, %c0_24] : memref<2x3xf32, #tpu.memory_space<smem>>
    %42 = vector.broadcast %41 : f32 to vector<22x22xf32>
    %43 = arith.mulf %14, %42 : vector<22x22xf32>
    %c1_25 = arith.constant 1 : index
    %44 = memref.load %arg2[%c1_25] : memref<2xf32, #tpu.memory_space<smem>>
    %45 = vector.broadcast %44 : f32 to vector<22x22xf32>
    %46 = arith.addf %43, %45 : vector<22x22xf32>
    %c1_26 = arith.constant 1 : index
    %c1_27 = arith.constant 1 : index
    %47 = memref.load %arg1[%c1_26, %c1_27] : memref<2x3xf32, #tpu.memory_space<smem>>
    %48 = vector.broadcast %47 : f32 to vector<22x22xf32>
    %49 = arith.mulf %16, %48 : vector<22x22xf32>
    %50 = arith.addf %46, %49 : vector<22x22xf32>
    %c1_28 = arith.constant 1 : index
    %c2_29 = arith.constant 2 : index
    %51 = memref.load %arg1[%c1_28, %c2_29] : memref<2x3xf32, #tpu.memory_space<smem>>
    %52 = vector.broadcast %51 : f32 to vector<22x22xf32>
    %53 = arith.mulf %18, %52 : vector<22x22xf32>
    %54 = arith.addf %50, %53 : vector<22x22xf32>
    %cst_30 = arith.constant 0.000000e+00 : f32
    %55 = vector.broadcast %cst_30 : f32 to vector<22x22xf32>
    %56 = arith.maximumf %54, %55 : vector<22x22xf32>
    %c1_31 = arith.constant 1 : index
    %57 = memref.load %arg3[%c1_31] : memref<2xf32, #tpu.memory_space<smem>>
    %58 = vector.broadcast %57 : f32 to vector<22x22xf32>
    %59 = arith.select %12, %58, %56 : vector<22x22xi1>, vector<22x22xf32>
    %c0_32 = arith.constant 0 : index
    %c1_33 = arith.constant 1 : index
    %c0_34 = arith.constant 0 : index
    %c0_35 = arith.constant 0 : index
    %60 = vector.load %arg5[%c0_32, %c1_33, %c0_34, %c0_35] : memref<1x2x22x22xf32, #tpu.memory_space<vmem>>, vector<1x1x22x22xf32>
    %61 = vector.shape_cast %60 : vector<1x1x22x22xf32> to vector<22x22xf32>
    %62 = vector.shape_cast %59 : vector<22x22xf32> to vector<1x1x22x22xf32>
    tpu.vector_store %arg5[%c0_32, %c1_33, %c0_34, %c0_35], %62 {strides = array<i32>} : memref<1x2x22x22xf32, #tpu.memory_space<vmem>>, vector<1x1x22x22xf32>,
    return
  }
  func.func @transform_0(%arg0: i32) -> (i32, i32) {
    %c0_i32 = arith.constant 0 : i32
    %c0_i32_0 = arith.constant 0 : i32
    %c0_i32_1 = arith.constant 0 : i32
    return %c0_i32, %c0_i32_0 : i32, i32
  }
  func.func @transform_1(%arg0: i32) -> i32 {
    %c0_i32 = arith.constant 0 : i32
    %c0_i32_0 = arith.constant 0 : i32
    return %c0_i32 : i32
  }
  func.func @transform_2(%arg0: i32) -> i32 {
    %c0_i32 = arith.constant 0 : i32
    %c0_i32_0 = arith.constant 0 : i32
    return %c0_i32 : i32
  }
  func.func @transform_3(%arg0: i32) -> (i32, i32, i32, i32) {
    %c0_i32 = arith.constant 0 : i32
    %c0_i32_0 = arith.constant 0 : i32
    %c0_i32_1 = arith.constant 0 : i32
    %c0_i32_2 = arith.constant 0 : i32
    return %arg0, %c0_i32, %c0_i32_0, %c0_i32_1 : i32, i32, i32, i32
  }
  func.func @transform_4(%arg0: i32) -> (i32, i32, i32, i32) {
    %c0_i32 = arith.constant 0 : i32
    %c0_i32_0 = arith.constant 0 : i32
    %c0_i32_1 = arith.constant 0 : i32
    %c0_i32_2 = arith.constant 0 : i32
    return %arg0, %c0_i32, %c0_i32_0, %c0_i32_1 : i32, i32, i32, i32
  }
}

</mosaic_0001>

<llo_original>
// kernel: tpu_custom_call.1
$region0: #{tpu_custom_call.1}
  #allocation0 [shape = 'u32[]', space=smem, size = 0x4, offset = 0x4, fixed_abs, tag = 'smem constant byte address 0x4 - core index']
  #allocation1 [shape = 'u32[144,128]{1,0:T(1,128)}', space=vmem, size = 0x12000, scoped, tag = 'internal scratch']
  %s0 = inlined_call_operand.vmem [shape: f32[2,3], index: 0, kind: input, shape index: {}]
  %s1 = inlined_call_operand.vmem [shape: f32[2], index: 1, kind: input, shape index: {}]
  %s2 = inlined_call_operand.vmem [shape: f32[2], index: 2, kind: input, shape index: {}]
  %s3 = inlined_call_operand.vmem [shape: f32[2,3,22,22], index: 3, kind: input, shape index: {}]
  %s4 = inlined_call_operand.vmem [shape: f32[2,2,22,22], index: 4, kind: output, shape index: {}]
  %s5 = sld [smem:[#allocation0]]
  $region61: #{tpu_custom_call.1} parent=0
    _
  %s7 = ssub.s32 1, %s5
  %s8 = scalar_select 0, %s7, %s5
  $region1: #{tpu_custom_call.1} parent=0
    #allocation2 [shape = 'u8[1024]{0}', space=smem, size = 0x400, scoped, tag = 'input window, operand 0, single buffered']
    #allocation3 [shape = 's32[2]{0}', space=sflag, size = 0x8, scoped, tag = 'scoped memory for tpu_custom_call.1']
    #allocation4 [shape = 'u8[512]{0}', space=smem, size = 0x200, scoped, tag = 'input window, operand 1, single buffered']
    #allocation5 [shape = 's32[1]{0}', space=sflag, size = 0x4, scoped, tag = 'scoped memory for tpu_custom_call.1']
    #allocation6 [shape = 'u8[512]{0}', space=smem, size = 0x200, scoped, tag = 'input window, operand 2, single buffered']
    %9 = vsyncpa [#allocation3], 0
    %10 = vsyncpa [#allocation5], 0
    loop: start=0, step=1, limit=4
    $region2: #{tpu_custom_call.1} parent=1 // loop_pre_header
      _
    $region3: #{tpu_custom_call.1} parent=1 // loop_header
      %s12 = sphi 0, %s16
      %p13 = scmp.ge.s32.totalorder %s12, 4
      %s20 = sphi 0, %s20
      %s22 = sphi 0, %s20
      %s23 = sphi 0, %s22
      %s37 = sphi 0, %s23
      %s41 = sphi 0, %s41
      %s43 = sphi 0, %s41
      %s44 = sphi 0, %s43
      %s58 = sphi 0, %s44
      %s62 = sphi 0, %s62
      %s64 = sphi 0, %s62
      %s65 = sphi 0, %s64
      %s79 = sphi 0, %s65
      %s85 = sphi 0, %s87
      %s88 = sphi 0, %s85
      %s89 = sphi 0, %s88
      %s105 = sphi 0, %s89
      %s111 = sphi 0, %s113
      %s114 = sphi 0, %s111
      %s115 = sphi 0, %s114
      %s131 = sphi 0, %s115
    $region4: #{tpu_custom_call.1} parent=1 // loop_header_branch
      %15 = sbr.rel (%p13) target = $region8
    $region5: #{tpu_custom_call.1} parent=1 // loop_body
      %s17 = ssub.s32 %s12, 1
      %s18 = ssub.s32 %s12, 2
      %s19 = sadd.s32 %s12, 1
      %s21 = sadd.s32 %s20, 1
      %p24 = scmp.eq.s32.totalorder %s12, 1
      %p25 = scmp.ne.s32.totalorder %s20, %s22
      %p26 = scmp.eq.s32.totalorder %s12, 0
      %p27 = por %p25, %p26
      %p28 = scmp.ne.s32.totalorder %s20, %s22
      %p29 = scmp.eq.s32.totalorder %s17, 1
      %p30 = por %p28, %p29
      %p31 = scmp.ne.s32.totalorder %s22, %s23
      %p32 = scmp.eq.s32.totalorder %s17, 0
      %p33 = por %p31, %p32
      %p34 = scmp.ne.s32.totalorder %s22, %s23
      %p35 = scmp.eq.s32.totalorder %s18, 1
      %p36 = por %p34, %p35
      %p38 = scmp.ne.s32.totalorder %s23, %s37
      %p39 = scmp.eq.s32.totalorder %s18, 0
      %p40 = por %p38, %p39
      %s42 = sadd.s32 %s41, 1
      %p45 = scmp.eq.s32.totalorder %s12, 1
      %p46 = scmp.ne.s32.totalorder %s41, %s43
      %p47 = scmp.eq.s32.totalorder %s12, 0
      %p48 = por %p46, %p47
      %p49 = scmp.ne.s32.totalorder %s41, %s43
      %p50 = scmp.eq.s32.totalorder %s17, 1
      %p51 = por %p49, %p50
      %p52 = scmp.ne.s32.totalorder %s43, %s44
      %p53 = scmp.eq.s32.totalorder %s17, 0
      %p54 = por %p52, %p53
      %p55 = scmp.ne.s32.totalorder %s43, %s44
      %p56 = scmp.eq.s32.totalorder %s18, 1
      %p57 = por %p55, %p56
      %p59 = scmp.ne.s32.totalorder %s44, %s58
      %p60 = scmp.eq.s32.totalorder %s18, 0
      %p61 = por %p59, %p60
      %s63 = sadd.s32 %s62, 1
      %p66 = scmp.eq.s32.totalorder %s12, 1
      %p67 = scmp.ne.s32.totalorder %s62, %s64
      %p68 = scmp.eq.s32.totalorder %s12, 0
      %p69 = por %p67, %p68
      %p70 = scmp.ne.s32.totalorder %s62, %s64
      %p71 = scmp.eq.s32.totalorder %s17, 1
      %p72 = por %p70, %p71
      %p73 = scmp.ne.s32.totalorder %s64, %s65
      %p74 = scmp.eq.s32.totalorder %s17, 0
      %p75 = por %p73, %p74
      %p76 = scmp.ne.s32.totalorder %s64, %s65
      %p77 = scmp.eq.s32.totalorder %s18, 1
      %p78 = por %p76, %p77
      %p80 = scmp.ne.s32.totalorder %s65, %s79
      %p81 = scmp.eq.s32.totalorder %s18, 0
      %p82 = por %p80, %p81
      %s83 = ssub.s32 %s12, %s19
      %p84 = scmp.eq.s32.totalorder %s83, 0
      %s86 = sadd.s32 %s85, 1
      %s87 = scalar_select %p84, %s85, %s86
      %p90 = pneg %p84
      %p91 = scmp.eq.s32.totalorder %s12, 1
      %p92 = por %p90, %p91
      %p93 = scmp.ne.s32.totalorder %s85, %s88
      %p94 = scmp.eq.s32.totalorder %s12, 0
      %p95 = por %p93, %p94
      %p96 = scmp.ne.s32.totalorder %s85, %s88
      %p97 = scmp.eq.s32.totalorder %s17, 1
      %p98 = por %p96, %p97
      %p99 = scmp.ne.s32.totalorder %s88, %s89
      %p100 = scmp.eq.s32.totalorder %s17, 0
      %p101 = por %p99, %p100
      %p102 = scmp.ne.s32.totalorder %s88, %s89
      %p103 = scmp.eq.s32.totalorder %s18, 1
      %p104 = por %p102, %p103
      %p106 = scmp.ne.s32.totalorder %s89, %s105
      %p107 = scmp.eq.s32.totalorder %s18, 0
      %p108 = por %p106, %p107
      %s109 = ssub.s32 %s12, %s19
      %p110 = scmp.eq.s32.totalorder %s109, 0
      %s112 = sadd.s32 %s111, 1
      %s113 = scalar_select %p110, %s111, %s112
      %p116 = pneg %p110
      %p117 = scmp.eq.s32.totalorder %s12, 1
      %p118 = por %p116, %p117
      %p119 = scmp.ne.s32.totalorder %s111, %s114
      %p120 = scmp.eq.s32.totalorder %s12, 0
      %p121 = por %p119, %p120
      %p122 = scmp.ne.s32.totalorder %s111, %s114
      %p123 = scmp.eq.s32.totalorder %s17, 1
      %p124 = por %p122, %p123
      %p125 = scmp.ne.s32.totalorder %s114, %s115
      %p126 = scmp.eq.s32.totalorder %s17, 0
      %p127 = por %p125, %p126
      %p128 = scmp.ne.s32.totalorder %s114, %s115
      %p129 = scmp.eq.s32.totalorder %s18, 1
      %p130 = por %p128, %p129
      %p132 = scmp.ne.s32.totalorder %s115, %s131
      %p133 = scmp.eq.s32.totalorder %s18, 0
      %p134 = por %p132, %p133
      %p135 = scmp.le.s32.totalorder 1, %s12
      %p136 = scmp.lt.s32.totalorder %s12, 3
      %p137 = pnand %p135, %p136
      %p138 = pneg %p137
      // Predicated region
      $region9: #{tpu_custom_call.1} parent=5 // pred_check
        _
      $region10: #{tpu_custom_call.1} parent=5 // pred_check_branch
        %140 = sbr.rel (%p137) target = $region12
      $region11: #{tpu_custom_call.1} parent=5 // pred_region
        %s141 = ssub.s32 %s12, 1
        // Predicated region
        $region13: #{tpu_custom_call.1} parent=11 // pred_check
          %p142 = pneg %p33
        $region14: #{tpu_custom_call.1} parent=11 // pred_check_branch
          %144 = sbr.rel (%p142) target = $region16
        $region15: #{tpu_custom_call.1} parent=11 // pred_region
          %s146 = ssub.s32 32, 32
          %147 = vsyncadd [#allocation3], %s146
          %s149 = sshll.u32 %s0, 4
          %s150 = int_to_ptr.vmem [resolvable:$true] %s149
          %152 = dma.vmem_to_smem %s150, 32, [#allocation2], [#allocation3]
        $region16: #{tpu_custom_call.1} parent=11 // pred_fallthru
          _
        // Predicated region
        $region17: #{tpu_custom_call.1} parent=11 // pred_check
          %p153 = pneg %p54
        $region18: #{tpu_custom_call.1} parent=11 // pred_check_branch
          %155 = sbr.rel (%p153) target = $region20
        $region19: #{tpu_custom_call.1} parent=11 // pred_region
          %s157 = ssub.s32 16, 16
          %158 = vsyncadd [#allocation5], %s157
          %s160 = sshll.u32 %s1, 4
          %s161 = int_to_ptr.vmem [resolvable:$true] %s160
          %163 = dma.vmem_to_smem %s161, 16, [#allocation4], [#allocation5]
        $region20: #{tpu_custom_call.1} parent=11 // pred_fallthru
          _
        // Predicated region
        $region21: #{tpu_custom_call.1} parent=11 // pred_check
          %p164 = pneg %p75
        $region22: #{tpu_custom_call.1} parent=11 // pred_check_branch
          %166 = sbr.rel (%p164) target = $region24
        $region23: #{tpu_custom_call.1} parent=11 // pred_region
          %s168 = ssub.s32 16, 16
          %169 = vsyncadd [#allocation5], %s168
          %s171 = sshll.u32 %s2, 4
          %s172 = int_to_ptr.vmem [resolvable:$true] %s171
          %174 = dma.vmem_to_smem %s172, 16, [#allocation6], [#allocation5]
        $region24: #{tpu_custom_call.1} parent=11 // pred_fallthru
          _
      $region12: #{tpu_custom_call.1} parent=5 // pred_fallthru
        _
      %p175 = scmp.lt.s32.totalorder %s12, 2
      // Predicated region
      $region25: #{tpu_custom_call.1} parent=5 // pred_check
        %p176 = pneg %p175
      $region26: #{tpu_custom_call.1} parent=5 // pred_check_branch
        %178 = sbr.rel (%p176) target = $region28
      $region27: #{tpu_custom_call.1} parent=5 // pred_region
        // Predicated region
        $region29: #{tpu_custom_call.1} parent=27 // pred_check
          %p179 = pneg %p95
        $region30: #{tpu_custom_call.1} parent=27 // pred_check_branch
          %181 = sbr.rel (%p179) target = $region32
        $region31: #{tpu_custom_call.1} parent=27 // pred_region
          %p182 = scmp.lt.s32.totalorder %s12, 1
          %s183 = scalar_select %p182, %s12, 1
          %s184 = smul.addr %s183, 9
          %s185 = smul.addr %s184, 8
          %s186 = scalar_lea.vmem %s3, %s185
        $region32: #{tpu_custom_call.1} parent=27 // pred_fallthru
          _
      $region28: #{tpu_custom_call.1} parent=5 // pred_fallthru
        _
      %p187 = scmp.le.s32.totalorder 1, %s12
      %p188 = scmp.lt.s32.totalorder %s12, 3
      %p189 = pnand %p187, %p188
      %p190 = pneg %p189
      // Predicated region
      $region33: #{tpu_custom_call.1} parent=5 // pred_check
        _
      $region34: #{tpu_custom_call.1} parent=5 // pred_check_branch
        %192 = sbr.rel (%p189) target = $region36
      $region35: #{tpu_custom_call.1} parent=5 // pred_region
        %s193 = ssub.s32 %s12, 1
        // Predicated region
        $region37: #{tpu_custom_call.1} parent=35 // pred_check
          %p194 = pneg %p33
        $region38: #{tpu_custom_call.1} parent=35 // pred_check_branch
          %196 = sbr.rel (%p194) target = $region40
        $region39: #{tpu_custom_call.1} parent=35 // pred_region
          %197 = dma.done [#allocation3], 32
        $region40: #{tpu_custom_call.1} parent=35 // pred_fallthru
          _
        // Predicated region
        $region41: #{tpu_custom_call.1} parent=35 // pred_check
          %p198 = pneg %p54
        $region42: #{tpu_custom_call.1} parent=35 // pred_check_branch
          %200 = sbr.rel (%p198) target = $region44
        $region43: #{tpu_custom_call.1} parent=35 // pred_region
          %201 = dma.done [#allocation5], 16
        $region44: #{tpu_custom_call.1} parent=35 // pred_fallthru
          _
        // Predicated region
        $region45: #{tpu_custom_call.1} parent=35 // pred_check
          %p202 = pneg %p75
        $region46: #{tpu_custom_call.1} parent=35 // pred_check_branch
          %204 = sbr.rel (%p202) target = $region48
        $region47: #{tpu_custom_call.1} parent=35 // pred_region
          %205 = dma.done [#allocation5], 16
        $region48: #{tpu_custom_call.1} parent=35 // pred_fallthru
          _
        %206 = sfence
        %p207 = pneg %p33
        %p208 = pneg %p30
        %p209 = pneg %p54
        %p210 = pneg %p51
        %p211 = pneg %p75
        %p212 = pneg %p72
        %p213 = scmp.lt.s32.totalorder %s17, 1
        %s214 = scalar_select %p213, %s17, 1
        %s215 = smul.addr %s214, 9
        %s216 = smul.addr %s215, 8
        %s217 = scalar_lea.vmem %s3, %s216
        %p218 = pneg %p101
        %p219 = pneg %p98
        %p220 = pneg %p127
        %p221 = pneg %p124
        %p222 = scmp.lt.s32.totalorder %s17, 1
        %s223 = scalar_select %p222, %s17, 1
        %s224 = smul.addr %s223, 6
        %s225 = smul.addr %s224, 8
        %s226 = scalar_lea.vmem %s4, %s225
        %p227 = scmp.lt.s32.totalorder %s17, 1
        %s228 = scalar_select %p227, %s17, 1
        %s229 = smul.addr %s228, 9
        %s230 = smul.addr %s229, 8
        %s231 = scalar_lea.vmem %s3, %s230
        %p232 = scmp.lt.s32.totalorder %s17, 1
        %s233 = scalar_select %p232, %s17, 1
        %s234 = smul.addr %s233, 6
        %s235 = smul.addr %s234, 8
        %s236 = scalar_lea.vmem %s4, %s235
        %v237 = vlaneseq
        %v238 = vshrl.u32 %v237, 7
        %v239 = vadd.s32 %v238, 8
        %v240 = vadd.s32 %v238, 16
        %v241 = vlaneseq
        %v242 = vand.u32 %v241, 127
        %vm243 = vcmp.eq.s32.totalorder %v238, 0
        %vm244 = vcmp.eq.s32.totalorder %v239, 0
        %vm245 = vcmp.eq.s32.totalorder %v240, 0
        %vm246 = vcmp.eq.s32.totalorder %v238, 21
        %vm247 = vcmp.eq.s32.totalorder %v239, 21
        %vm248 = vcmp.eq.s32.totalorder %v240, 21
        %vm249 = vmor %vm243, %vm246
        %vm250 = vmor %vm244, %vm247
        %vm251 = vmor %vm245, %vm248
        %vm252 = vcmp.eq.s32.totalorder %v242, 0
        %vm253 = vmor %vm249, %vm252
        %vm254 = vmor %vm250, %vm252
        %vm255 = vmor %vm251, %vm252
        %vm256 = vcmp.eq.s32.totalorder %v242, 21
        %vm257 = vmor %vm253, %vm256
        %vm258 = vmor %vm254, %vm256
        %vm259 = vmor %vm255, %vm256
        %v260 = vld [vmem:[%s231] sm:$0xff]
        %v261 = vld [vmem:[%s231 + $0x8] sm:$0xff]
        %v262 = vld [vmem:[%s231 + $0x10] sm:$0x3f]
        %s263 = scalar_lea.vmem %s231, 24
        %v264 = vld [vmem:[%s263] sm:$0xff]
        %v265 = vld [vmem:[%s263 + $0x8] sm:$0xff]
        %v266 = vld [vmem:[%s263 + $0x10] sm:$0x3f]
        %s267 = scalar_lea.vmem %s231, 48
        %v268 = vld [vmem:[%s267] sm:$0xff]
        %v269 = vld [vmem:[%s267 + $0x8] sm:$0xff]
        %v270 = vld [vmem:[%s267 + $0x10] sm:$0x3f]
        %s271 = sld [smem:[#allocation2]]
        %v272 = vstv %s271
        %v273 = vmul.f32 %v260, %v272
        %v274 = vmul.f32 %v261, %v272
        %v275 = vmul.f32 %v262, %v272
        %s276 = sld [smem:[#allocation4]]
        %v277 = vstv %s276
        %v278 = vadd.f32 %v273, %v277
        %v279 = vadd.f32 %v274, %v277
        %v280 = vadd.f32 %v275, %v277
        %s281 = sld [smem:[#allocation2 + $0x1]]
        %v282 = vstv %s281
        %v283 = vmul.f32 %v264, %v282
        %v284 = vmul.f32 %v265, %v282
        %v285 = vmul.f32 %v266, %v282
        %v286 = vadd.f32 %v278, %v283
        %v287 = vadd.f32 %v279, %v284
        %v288 = vadd.f32 %v280, %v285
        %s289 = sld [smem:[#allocation2 + $0x2]]
        %v290 = vstv %s289
        %v291 = vmul.f32 %v268, %v290
        %v292 = vmul.f32 %v269, %v290
        %v293 = vmul.f32 %v270, %v290
        %v294 = vadd.f32 %v286, %v291
        %v295 = vadd.f32 %v287, %v292
        %v296 = vadd.f32 %v288, %v293
        %v297 = vmax.f32 %v294, 0.0
        %v298 = vmax.f32 %v295, 0.0
        %v299 = vmax.f32 %v296, 0.0
        %s300 = sld [smem:[#allocation6]]
        %v301 = vstv %s300
        %v302 = vsel %vm257, %v301, %v297
        %v303 = vsel %vm258, %v301, %v298
        %v304 = vsel %vm259, %v301, %v299
        %vm305 = vcmask 179200
        %306 = vst.msk [vmem:[%s236] sm:$0xff] %vm305, %v302
        %307 = vst.msk [vmem:[%s236 + $0x8] sm:$0xff] %vm305, %v303
        %vm308 = vcmask 177152
        %309 = vst.msk [vmem:[%s236 + $0x10] sm:$0x3f] %vm308, %v304
        %s310 = sld [smem:[#allocation2 + $0x80]]
        %v311 = vstv %s310
        %v312 = vmul.f32 %v260, %v311
        %v313 = vmul.f32 %v261, %v311
        %v314 = vmul.f32 %v262, %v311
        %s315 = sld [smem:[#allocation4 + $0x1]]
        %v316 = vstv %s315
        %v317 = vadd.f32 %v312, %v316
        %v318 = vadd.f32 %v313, %v316
        %v319 = vadd.f32 %v314, %v316
        %s320 = sld [smem:[#allocation2 + $0x81]]
        %v321 = vstv %s320
        %v322 = vmul.f32 %v264, %v321
        %v323 = vmul.f32 %v265, %v321
        %v324 = vmul.f32 %v266, %v321
        %v325 = vadd.f32 %v317, %v322
        %v326 = vadd.f32 %v318, %v323
        %v327 = vadd.f32 %v319, %v324
        %s328 = sld [smem:[#allocation2 + $0x82]]
        %v329 = vstv %s328
        %v330 = vmul.f32 %v268, %v329
        %v331 = vmul.f32 %v269, %v329
        %v332 = vmul.f32 %v270, %v329
        %v333 = vadd.f32 %v325, %v330
        %v334 = vadd.f32 %v326, %v331
        %v335 = vadd.f32 %v327, %v332
        %v336 = vmax.f32 %v333, 0.0
        %v337 = vmax.f32 %v334, 0.0
        %v338 = vmax.f32 %v335, 0.0
        %s339 = sld [smem:[#allocation6 + $0x1]]
        %v340 = vstv %s339
        %v341 = vsel %vm257, %v340, %v336
        %v342 = vsel %vm258, %v340, %v337
        %v343 = vsel %vm259, %v340, %v338
        %s344 = scalar_lea.vmem %s236, 24
        %345 = vst.msk [vmem:[%s344] sm:$0xff] %vm305, %v341
        %346 = vst.msk [vmem:[%s344 + $0x8] sm:$0xff] %vm305, %v342
        %347 = vst.msk [vmem:[%s344 + $0x10] sm:$0x3f] %vm308, %v343
        %p348 = scmp.lt.s32.totalorder %s17, 1
        %s349 = scalar_select %p348, %s17, 1
        %s350 = smul.addr %s349, 6
        %s351 = smul.addr %s350, 8
        %s352 = scalar_lea.vmem %s4, %s351
        // Predicated region
        $region49: #{tpu_custom_call.1} parent=35 // pred_check
          %p353 = pneg %p124
        $region50: #{tpu_custom_call.1} parent=35 // pred_check_branch
          %355 = sbr.rel (%p353) target = $region52
        $region51: #{tpu_custom_call.1} parent=35 // pred_region
          _
        $region52: #{tpu_custom_call.1} parent=35 // pred_fallthru
          _
      $region36: #{tpu_custom_call.1} parent=5 // pred_fallthru
        _
      %p356 = scmp.le.s32.totalorder 2, %s12
      // Predicated region
      $region53: #{tpu_custom_call.1} parent=5 // pred_check
        %p357 = pneg %p356
      $region54: #{tpu_custom_call.1} parent=5 // pred_check_branch
        %359 = sbr.rel (%p357) target = $region56
      $region55: #{tpu_custom_call.1} parent=5 // pred_region
        %s360 = ssub.s32 %s12, 2
        // Predicated region
        $region57: #{tpu_custom_call.1} parent=55 // pred_check
          %p361 = pneg %p130
        $region58: #{tpu_custom_call.1} parent=55 // pred_check_branch
          %363 = sbr.rel (%p361) target = $region60
        $region59: #{tpu_custom_call.1} parent=55 // pred_region
          %p364 = scmp.lt.s32.totalorder %s18, 1
          %s365 = scalar_select %p364, %s18, 1
          %s366 = smul.addr %s365, 6
          %s367 = smul.addr %s366, 8
          %s368 = scalar_lea.vmem %s4, %s367
        $region60: #{tpu_custom_call.1} parent=55 // pred_fallthru
          _
      $region56: #{tpu_custom_call.1} parent=5 // pred_fallthru
        _
    $region6: #{tpu_custom_call.1} parent=1 // loop_footer
      %s16 = sadd.s32 1, %s12
    $region7: #{tpu_custom_call.1} parent=1 // loop_footer_branch
      %11 = sbr.rel target = $region3
    $region8: #{tpu_custom_call.1} parent=1 // loop_exit
      _
    %369 = vsyncpa [#allocation3], 1
    %s370 = scalar_lea.sflag [#allocation3], 1
    %371 = vsyncpa %s370, 1
    %372 = vsyncpa [#allocation5], 1

</llo_original>
